<compile_context>
chip_gen: v7x
topology: tpu7x:2x2x1
jax: 0.10.0
libtpu: 0.0.40
codegen_flags: <defaults>
</compile_context>

<pallas_src>
import functools
import math

import jax
import jax.numpy as jnp
from jax.experimental import pallas as pl
from jax.experimental.pallas import tpu as pltpu


def _round_up(v, m):
    return -(-v // m) * m


def _slab_bytes(rows, cols, itemsize, n_f32_temps):
    """Estimated VMEM bytes for one (rows, cols) slab: double-buffered input and
    output blocks in the native dtype (dtype-aware sublane padding) plus
    full-size f32 temporaries used inside the kernel."""
    sub_native = max(1, 32 // itemsize)          # 8 for f32, 16 for bf16, 32 for int8
    cols_p = _round_up(cols, 128)                # lane padding
    native = _round_up(rows, sub_native) * cols_p * itemsize * 4   # 2x(in) + 2x(out)
    temps = _round_up(rows, 8) * cols_p * 4 * n_f32_temps
    return native + temps


def _tpu_vmem_and_cores():
    """Best-effort (vmem_bytes_per_core, tensorcores_per_chip) with safe fallbacks."""
    vmem = 64 * 1024 * 1024      # v7x-safe default (64 MiB per TensorCore)
    cores = 2                    # conservative: assume megacore sharding exists
    try:
        info = pltpu.get_tpu_info()
        v = getattr(info, "vmem_capacity_bytes", None)
        if v:
            vmem = int(v)
        for name in ("num_tensorcores", "tensorcores_per_chip", "num_cores", "core_count"):
            c = getattr(info, name, None)
            if c:
                cores = int(c)
                break
    except Exception:
        pass
    try:
        kind = (jax.devices()[0].device_kind or "").lower()
        if any(tag in kind for tag in ("v5 lite", "v5e", "v6")):
            cores = 1                                   # single TensorCore per chip
        if "v7" in kind:
            vmem = min(vmem, 64 * 1024 * 1024)          # 64 MiB per TC on v7x
    except Exception:
        pass
    return vmem, cores


def _spec_norm_packed_kernel(x_ref, o_ref, *, eps, t_total, r, f):
    """Lane-dense path.  Block layout (G, T//r, r*F): the lane axis packs the r
    time-remainder groups of the F feature columns, so lanes are a dense
    multiple of 128 even when F < 128.  Reduction over T = sublane reduction
    over T//r followed by a fold over the r lane groups."""
    x = x_ref[...].astype(jnp.float32)                    # (G, Tr, L)
    lanes = r * f

    def group_sum(v):
        # v: (G, 1, L).  Returns (G, 1, L) where lane q*F+f' holds the sum of v
        # over all r remainder groups of feature f' (log2(r) XLU lane rolls;
        # r is always a power of two, shifts are multiples of F so the feature
        # residue is preserved).
        acc = v
        shift = f
        while shift < lanes:
            acc = acc + pltpu.roll(acc, shift=shift, axis=2)
            shift *= 2
        return acc

    # pass 1: mean over the full T axis.
    mean = group_sum(jnp.sum(x, axis=1, keepdims=True)) / jnp.float32(t_total)
    # pass 2: unbiased variance (torch.std default).  T == 1 -> inf/NaN, as torch.
    var = group_sum(jnp.sum(jnp.square(x - mean), axis=1, keepdims=True)) \
        / jnp.float32(t_total - 1)
    inv = pl.reciprocal(jnp.sqrt(var) + jnp.float32(eps), approx=False)   # (G, 1, L)
    # (x - mean) * inv written as x*inv - mean*inv so no full-size centered
    # temporary has to stay live into the store.
    o_ref[...] = (x * inv - mean * inv).astype(o_ref.dtype)


def _spec_norm_kernel(x_ref, o_ref, *, eps, t_total):
    """Plain path: block (G, T, Fb), reduction over axis 1 (sublanes)."""
    x = x_ref[...].astype(jnp.float32)                    # (G, T, Fb)
    mean = jnp.sum(x, axis=1, keepdims=True) / jnp.float32(t_total)
    var = jnp.sum(jnp.square(x - mean), axis=1, keepdims=True) / jnp.float32(t_total - 1)
    inv = pl.reciprocal(jnp.sqrt(var) + jnp.float32(eps), approx=False)
    o_ref[...] = (x * inv - mean * inv).astype(o_ref.dtype)


def spec_normalize(x, dim=2, eps=1e-8, *, block_budget_bytes=None,
                   vmem_limit_bytes=None, donate_input=False):
    """Pallas TPU implementation of SpecNormalize.forward for 4D (B, C, T, F)
    input, normalizing along dim=2 (unbiased std, eps added to std)."""
    assert x.ndim == 4 and dim == 2, "kernel implemented for 4D input, dim=2"
    B, C, T, F = x.shape
    N = B * C
    itemsize = jnp.dtype(x.dtype).itemsize
    n_f32_temps = 2 if itemsize >= 4 else 3   # working temp (+ f32 upcast copy)

    phys_vmem, cores = _tpu_vmem_and_cores()
    if vmem_limit_bytes is None:
        vmem_limit_bytes = (phys_vmem * 3) // 4     # 48 MiB (v7x) / 96 MiB (v5e, v6e)
    if block_budget_bytes is None:
        block_budget_bytes = phys_vmem // 2         # 32 MiB (v7x) / 64 MiB (v5e, v6e)

    cost = pl.CostEstimate(
        flops=7 * N * T * F,
        transcendentals=2 * N * F,
        bytes_accessed=2 * N * T * F * itemsize,
    )
    alias = {0: 0} if donate_input else {}

    # Lane-packing factor: smallest r (a power of two) with (r * F) % 128 == 0.
    r = 128 // math.gcd(F, 128)
    use_packed = r > 1 and T % r == 0

    if use_packed:
        tr, lanes = T // r, r * F
        slab = _slab_bytes(tr, lanes, itemsize, n_f32_temps)
        # TODO(synk): if even a single packed slab exceeds the budget (extreme
        # T*F), add a two-pass T-tiled reduction path.
        g = max(1, block_budget_bytes // slab)
        g = min(g, N)
        if cores >= 2 and N >= 2:
            g = min(g, -(-N // 2))          # keep >=2 steps so both TCs get work
        n_grid = pl.cdiv(N, g)

        kernel = functools.partial(_spec_norm_packed_kernel, eps=eps,
                                   t_total=T, r=r, f=F)
        out = pl.pallas_call(
            kernel,
            out_shape=jax.ShapeDtypeStruct((N, tr, lanes), x.dtype),
            grid_spec=pltpu.PrefetchScalarGridSpec(
                num_scalar_prefetch=0,
                grid=(n_grid,),
                in_specs=[pl.BlockSpec((g, tr, lanes), lambda i: (i, 0, 0))],
                out_specs=pl.BlockSpec((g, tr, lanes), lambda i: (i, 0, 0)),
            ),
            compiler_params=pltpu.CompilerParams(
                dimension_semantics=("parallel",),
                vmem_limit_bytes=int(vmem_limit_bytes),
            ),
            cost_estimate=cost,
            input_output_aliases=alias,
        )(x.reshape(N, tr, lanes))          # free, contiguous reinterpretation
        return out.reshape(B, C, T, F)

    # ---------- unpacked path: F % 128 == 0, or T % r != 0 ----------
    if F % 128 == 0:
        # Prefer a full-F (fully contiguous) slab; shrink in 128-lane steps only
        # when a single (1, T, f_blk) slab would overflow the budget.
        k128 = _slab_bytes(T, 128, itemsize, n_f32_temps)
        f_blk = min(F, max(1, block_budget_bytes // k128) * 128)
        # TODO(synk): if even (1, T, 128) exceeds the budget (huge T), add a
        # two-pass T-tiled reduction path instead of relying on VMEM headroom.
    else:
        # TODO(synk): F not a multiple of 128 and T % r != 0 -> lanes padded
        # (F/128 utilization); a gather/pad-based relayout could recover lane
        # density here as well.
        f_blk = F
    f_grid = pl.cdiv(F, f_blk)

    slab = _slab_bytes(T, f_blk, itemsize, n_f32_temps)
    g = max(1, block_budget_bytes // slab)
    g = min(g, N)
    if cores >= 2 and f_grid == 1 and N >= 2:
        g = min(g, -(-N // 2))
    n_grid = pl.cdiv(N, g)

    kernel = functools.partial(_spec_norm_kernel, eps=eps, t_total=T)
    out = pl.pallas_call(
        kernel,
        out_shape=jax.ShapeDtypeStruct((N, T, F), x.dtype),
        grid_spec=pltpu.PrefetchScalarGridSpec(
            num_scalar_prefetch=0,
            grid=(n_grid, f_grid),
            in_specs=[pl.BlockSpec((g, T, f_blk), lambda i, j: (i, 0, j))],
            out_specs=pl.BlockSpec((g, T, f_blk), lambda i, j: (i, 0, j)),
        ),
        compiler_params=pltpu.CompilerParams(
            dimension_semantics=("parallel", "parallel"),
            vmem_limit_bytes=int(vmem_limit_bytes),
        ),
        cost_estimate=cost,
        input_output_aliases=alias,
    )(x.reshape(N, T, F))
    return out.reshape(B, C, T, F)


if __name__ == "__main__":
    key = jax.random.PRNGKey(0)
    B, C, T, F = 2, 4, 16, 16
    x = jax.random.normal(key, (B, C, T, F), dtype=jnp.float32)

    out = spec_normalize(x, dim=2, eps=1e-8)
    out = jax.block_until_ready(out)

    # reference (plain JAX, torch semantics: unbiased std, eps on std)
    mean = jnp.mean(x, axis=2, keepdims=True)
    std = jnp.std(x, axis=2, keepdims=True, ddof=1)
    ref = (x - mean) / (std + 1e-8)

    assert out.shape == x.shape
    assert jnp.max(jnp.abs(out - ref)) < 1e-5

    print("KERNEL_OK")
</pallas_src>

<mosaic_0001>
module attributes {stable_mosaic.version = 11 : i64} {
  func.func @_spec_norm_packed_kernel(%arg0: i32, %arg1: memref<4x2x128xf32, #tpu.memory_space<vmem>>, %arg2: memref<4x2x128xf32, #tpu.memory_space<vmem>>) attributes {dimension_semantics = [#tpu.dimension_semantics<parallel>], iteration_bounds = array<i64: 2>, scalar_prefetch = 0 : i64, scratch_operands = 0 : i64, tpu.core_type = #tpu.core_type<tc>, window_params = [{transform_indices = @transform_0, window_bounds = array<i64: 4, 2, 128>}, {transform_indices = @transform_1, window_bounds = array<i64: 4, 2, 128>}]} {
    %c0 = arith.constant 0 : index
    %c0_0 = arith.constant 0 : index
    %c0_1 = arith.constant 0 : index
    %0 = vector.load %arg1[%c0, %c0_0, %c0_1] : memref<4x2x128xf32, #tpu.memory_space<vmem>>, vector<4x2x128xf32>
    %cst = arith.constant dense<0.000000e+00> : vector<4x128xf32>
    %1 = vector.multi_reduction <add>, %0, %cst [1] : vector<4x2x128xf32> to vector<4x128xf32>
    %2 = vector.shape_cast %1 : vector<4x128xf32> to vector<4x1x128xf32>
    %c16_i32 = arith.constant 16 : i32
    %3 = tpu.dynamic_rotate %2 by %c16_i32 dim 2 : vector<4x1x128xf32>, i32 -> vector<4x1x128xf32>
    %4 = arith.addf %2, %3 : vector<4x1x128xf32>
    %c32_i32 = arith.constant 32 : i32
    %5 = tpu.dynamic_rotate %4 by %c32_i32 dim 2 : vector<4x1x128xf32>, i32 -> vector<4x1x128xf32>
    %6 = arith.addf %4, %5 : vector<4x1x128xf32>
    %c64_i32 = arith.constant 64 : i32
    %7 = tpu.dynamic_rotate %6 by %c64_i32 dim 2 : vector<4x1x128xf32>, i32 -> vector<4x1x128xf32>
    %8 = arith.addf %6, %7 : vector<4x1x128xf32>
    %cst_2 = arith.constant 1.600000e+01 : f32
    %9 = vector.broadcast %cst_2 : f32 to vector<4x1x128xf32>
    %10 = arith.divf %8, %9 : vector<4x1x128xf32>
    %11 = vector.broadcast %10 : vector<4x1x128xf32> to vector<4x2x128xf32>
    %12 = arith.subf %0, %11 : vector<4x2x128xf32>
    %13 = arith.mulf %12, %12 : vector<4x2x128xf32>
    %cst_3 = arith.constant dense<0.000000e+00> : vector<4x128xf32>
    %14 = vector.multi_reduction <add>, %13, %cst_3 [1] : vector<4x2x128xf32> to vector<4x128xf32>
    %15 = vector.shape_cast %14 : vector<4x128xf32> to vector<4x1x128xf32>
    %c16_i32_4 = arith.constant 16 : i32
    %16 = tpu.dynamic_rotate %15 by %c16_i32_4 dim 2 : vector<4x1x128xf32>, i32 -> vector<4x1x128xf32>
    %17 = arith.addf %15, %16 : vector<4x1x128xf32>
    %c32_i32_5 = arith.constant 32 : i32
    %18 = tpu.dynamic_rotate %17 by %c32_i32_5 dim 2 : vector<4x1x128xf32>, i32 -> vector<4x1x128xf32>
    %19 = arith.addf %17, %18 : vector<4x1x128xf32>
    %c64_i32_6 = arith.constant 64 : i32
    %20 = tpu.dynamic_rotate %19 by %c64_i32_6 dim 2 : vector<4x1x128xf32>, i32 -> vector<4x1x128xf32>
    %21 = arith.addf %19, %20 : vector<4x1x128xf32>
    %cst_7 = arith.constant 1.500000e+01 : f32
    %22 = vector.broadcast %cst_7 : f32 to vector<4x1x128xf32>
    %23 = arith.divf %21, %22 : vector<4x1x128xf32>
    %24 = math.sqrt %23 : vector<4x1x128xf32>
    %cst_8 = arith.constant 9.99999993E-9 : f32
    %25 = vector.broadcast %cst_8 : f32 to vector<4x1x128xf32>
    %26 = arith.addf %24, %25 : vector<4x1x128xf32>
    %27 = tpu.reciprocal %26 : vector<4x1x128xf32> -> vector<4x1x128xf32>
    %28 = vector.broadcast %27 : vector<4x1x128xf32> to vector<4x2x128xf32>
    %29 = arith.mulf %0, %28 : vector<4x2x128xf32>
    %30 = arith.mulf %10, %27 : vector<4x1x128xf32>
    %31 = vector.broadcast %30 : vector<4x1x128xf32> to vector<4x2x128xf32>
    %32 = arith.subf %29, %31 : vector<4x2x128xf32>
    %c0_9 = arith.constant 0 : index
    %c0_10 = arith.constant 0 : index
    %c0_11 = arith.constant 0 : index
    %33 = vector.load %arg2[%c0_9, %c0_10, %c0_11] : memref<4x2x128xf32, #tpu.memory_space<vmem>>, vector<4x2x128xf32>
    tpu.vector_store %arg2[%c0_9, %c0_10, %c0_11], %32 {strides = array<i32>} : memref<4x2x128xf32, #tpu.memory_space<vmem>>, vector<4x2x128xf32>,
    return
  }
  func.func @transform_0(%arg0: i32) -> (i32, i32, i32) {
    %c0_i32 = arith.constant 0 : i32
    %c0_i32_0 = arith.constant 0 : i32
    %c0_i32_1 = arith.constant 0 : i32
    return %arg0, %c0_i32, %c0_i32_0 : i32, i32, i32
  }
  func.func @transform_1(%arg0: i32) -> (i32, i32, i32) {
    %c0_i32 = arith.constant 0 : i32
    %c0_i32_0 = arith.constant 0 : i32
    %c0_i32_1 = arith.constant 0 : i32
    return %arg0, %c0_i32, %c0_i32_0 : i32, i32, i32
  }
}

</mosaic_0001>

<llo_original>
// kernel: tpu_custom_call.1
$region0: #{tpu_custom_call.1}
  #allocation0 [shape = 'u32[]', space=smem, size = 0x4, offset = 0x4, fixed_abs, tag = 'smem constant byte address 0x4 - core index']
  #allocation1 [shape = 'u32[144,128]{1,0:T(1,128)}', space=vmem, size = 0x12000, scoped, tag = 'internal scratch']
  %s0 = inlined_call_operand.hbm [shape: f32[8,2,128], index: 0, kind: input, shape index: {}]
  %s1 = inlined_call_operand.hbm [shape: f32[8,2,128], index: 1, kind: output, shape index: {}]
  %s2 = sld [smem:[#allocation0]]
  $region41: #{tpu_custom_call.1} parent=0
    _
  %s4 = ssub.s32 1, %s2
  %s5 = scalar_select 0, %s4, %s2
  $region1: #{tpu_custom_call.1} parent=0
    #allocation2 [shape = 'u8[8192]{0}', space=vmem, size = 0x2000, scoped, tag = 'input window, operand 0']
    #allocation3 [shape = 's32[2]{0}', space=sflag, size = 0x8, scoped, tag = 'scoped memory for tpu_custom_call.1']
    #allocation4 [shape = 's32[2]{0}', space=sflag, size = 0x8, scoped, tag = 'scoped memory for tpu_custom_call.1']
    #allocation5 [shape = 'u8[8192]{0}', space=vmem, size = 0x2000, scoped, tag = 'output window, operand 0']
    %6 = vsyncpa [#allocation3], 0
    %s7 = scalar_lea.sflag [#allocation3], 1
    %8 = vsyncpa %s7, 0
    %9 = vsyncpa [#allocation4], 0
    %s10 = scalar_lea.sflag [#allocation4], 1
    %11 = vsyncpa %s10, 0
    loop: start=0, step=1, limit=4
    $region2: #{tpu_custom_call.1} parent=1 // loop_pre_header
      _
    $region3: #{tpu_custom_call.1} parent=1 // loop_header
      %s13 = sphi 0, %s17
      %p14 = scmp.ge.s32.totalorder %s13, 4
      %s23 = sphi 0, %s25
      %s26 = sphi 0, %s23
      %s27 = sphi 0, %s26
      %s43 = sphi 0, %s27
      %s49 = sphi 0, %s51
      %s52 = sphi 0, %s49
      %s53 = sphi 0, %s52
      %s69 = sphi 0, %s53
    $region4: #{tpu_custom_call.1} parent=1 // loop_header_branch
      %16 = sbr.rel (%p14) target = $region8
    $region5: #{tpu_custom_call.1} parent=1 // loop_body
      %s18 = ssub.s32 %s13, 1
      %s19 = ssub.s32 %s13, 2
      %s20 = sadd.s32 %s13, 1
      %s21 = ssub.s32 %s13, %s20
      %p22 = scmp.eq.s32.totalorder %s21, 0
      %s24 = sadd.s32 %s23, 1
      %s25 = scalar_select %p22, %s23, %s24
      %p28 = pneg %p22
      %p29 = scmp.eq.s32.totalorder %s13, 1
      %p30 = por %p28, %p29
      %p31 = scmp.ne.s32.totalorder %s23, %s26
      %p32 = scmp.eq.s32.totalorder %s13, 0
      %p33 = por %p31, %p32
      %p34 = scmp.ne.s32.totalorder %s23, %s26
      %p35 = scmp.eq.s32.totalorder %s18, 1
      %p36 = por %p34, %p35
      %p37 = scmp.ne.s32.totalorder %s26, %s27
      %p38 = scmp.eq.s32.totalorder %s18, 0
      %p39 = por %p37, %p38
      %p40 = scmp.ne.s32.totalorder %s26, %s27
      %p41 = scmp.eq.s32.totalorder %s19, 1
      %p42 = por %p40, %p41
      %p44 = scmp.ne.s32.totalorder %s27, %s43
      %p45 = scmp.eq.s32.totalorder %s19, 0
      %p46 = por %p44, %p45
      %s47 = ssub.s32 %s13, %s20
      %p48 = scmp.eq.s32.totalorder %s47, 0
      %s50 = sadd.s32 %s49, 1
      %s51 = scalar_select %p48, %s49, %s50
      %p54 = pneg %p48
      %p55 = scmp.eq.s32.totalorder %s13, 1
      %p56 = por %p54, %p55
      %p57 = scmp.ne.s32.totalorder %s49, %s52
      %p58 = scmp.eq.s32.totalorder %s13, 0
      %p59 = por %p57, %p58
      %p60 = scmp.ne.s32.totalorder %s49, %s52
      %p61 = scmp.eq.s32.totalorder %s18, 1
      %p62 = por %p60, %p61
      %p63 = scmp.ne.s32.totalorder %s52, %s53
      %p64 = scmp.eq.s32.totalorder %s18, 0
      %p65 = por %p63, %p64
      %p66 = scmp.ne.s32.totalorder %s52, %s53
      %p67 = scmp.eq.s32.totalorder %s19, 1
      %p68 = por %p66, %p67
      %p70 = scmp.ne.s32.totalorder %s53, %s69
      %p71 = scmp.eq.s32.totalorder %s19, 0
      %p72 = por %p70, %p71
      %p73 = scmp.le.s32.totalorder 1, %s13
      %p74 = scmp.lt.s32.totalorder %s13, 3
      %p75 = pnand %p73, %p74
      %p76 = pneg %p75
      // Predicated region
      $region9: #{tpu_custom_call.1} parent=5 // pred_check
        _
      $region10: #{tpu_custom_call.1} parent=5 // pred_check_branch
        %78 = sbr.rel (%p75) target = $region12
      $region11: #{tpu_custom_call.1} parent=5 // pred_region
        %s79 = ssub.s32 %s13, 1
      $region12: #{tpu_custom_call.1} parent=5 // pred_fallthru
        _
      %p80 = scmp.lt.s32.totalorder %s13, 2
      // Predicated region
      $region13: #{tpu_custom_call.1} parent=5 // pred_check
        %p81 = pneg %p80
      $region14: #{tpu_custom_call.1} parent=5 // pred_check_branch
        %83 = sbr.rel (%p81) target = $region16
      $region15: #{tpu_custom_call.1} parent=5 // pred_region
        // Predicated region
        $region17: #{tpu_custom_call.1} parent=15 // pred_check
          %p84 = pneg %p33
        $region18: #{tpu_custom_call.1} parent=15 // pred_check_branch
          %86 = sbr.rel (%p84) target = $region20
        $region19: #{tpu_custom_call.1} parent=15 // pred_region
          %s87 = sand.u32 %s23, 1
          %s88 = scalar_lea.sflag [#allocation3], %s87
          %s89 = sand.u32 %s23, 1
          %s90 = smul.addr %s89, 8
          %s91 = scalar_lea.vmem [#allocation2], %s90
          %s92 = smul.u32 4, %s13
          %s94 = ssub.s32 128, 128
          %95 = vsyncadd %s88, %s94
          %s96 = smul.addr %s92, 32
          %s97 = scalar_lea.hbm %s0, %s96
          %s98 = sshll.u32 %s91, 4
          %s99 = int_to_ptr.vmem [resolvable:$true] %s98
          %104 = dma.hbm_to_vmem [thread:$0]  %s97, 128, %s99, %s88, 32, 32, 2
        $region20: #{tpu_custom_call.1} parent=15 // pred_fallthru
          _
      $region16: #{tpu_custom_call.1} parent=5 // pred_fallthru
        _
      %p105 = scmp.le.s32.totalorder 1, %s13
      %p106 = scmp.lt.s32.totalorder %s13, 3
      %p107 = pnand %p105, %p106
      %p108 = pneg %p107
      // Predicated region
      $region21: #{tpu_custom_call.1} parent=5 // pred_check
        _
      $region22: #{tpu_custom_call.1} parent=5 // pred_check_branch
        %110 = sbr.rel (%p107) target = $region24
      $region23: #{tpu_custom_call.1} parent=5 // pred_region
        %s111 = ssub.s32 %s13, 1
        %s112 = sand.u32 %s26, 1
        %s113 = scalar_lea.sflag [#allocation3], %s112
        %s114 = sand.u32 %s26, 1
        %s115 = smul.addr %s114, 8
        %s116 = scalar_lea.vmem [#allocation2], %s115
        // Predicated region
        $region25: #{tpu_custom_call.1} parent=23 // pred_check
          %p117 = pneg %p39
        $region26: #{tpu_custom_call.1} parent=23 // pred_check_branch
          %119 = sbr.rel (%p117) target = $region28
        $region27: #{tpu_custom_call.1} parent=23 // pred_region
          %120 = dma.done %s113, 128
        $region28: #{tpu_custom_call.1} parent=23 // pred_fallthru
          _
        %s121 = sand.u32 %s26, 1
        %s122 = scalar_lea.sflag [#allocation3], %s121
        %s123 = sand.u32 %s26, 1
        %s124 = smul.addr %s123, 8
        %s125 = scalar_lea.vmem [#allocation2], %s124
        %p126 = pneg %p39
        %p127 = pneg %p36
        %p128 = pneg %p65
        %p129 = pneg %p62
        %s130 = sand.u32 %s52, 1
        %s131 = scalar_lea.sflag [#allocation4], %s130
        %s132 = sand.u32 %s52, 1
        %s133 = smul.addr %s132, 8
        %s134 = scalar_lea.vmem [#allocation5], %s133
        %s135 = smul.u32 4, %s18
        %s136 = smul.u32 4, %s18
        %v137 = vld [vmem:[%s116] sm:$0x3]
        %v138 = vld [vmem:[%s116 + $0x2] sm:$0x3]
        %v139 = vld [vmem:[%s116 + $0x4] sm:$0x3]
        %v140 = vld [vmem:[%s116 + $0x6] sm:$0x3]
        %vm141 = vcmask 1041408
        %v142 = vsel %vm141, %v137, 0.0
        %v143 = vrot.slane %v142, 4
        %v144 = vadd.f32 %v142, %v143
        %v145 = vrot.slane %v144, 2
        %v146 = vadd.f32 %v144, %v145
        %v147 = vrot.slane %v146, 1
        %v148 = vadd.f32 %v146, %v147
        %v149 = vsel %vm141, %v138, 0.0
        %v150 = vrot.slane %v149, 4
        %v151 = vadd.f32 %v149, %v150
        %v152 = vrot.slane %v151, 2
        %v153 = vadd.f32 %v151, %v152
        %v154 = vrot.slane %v153, 1
        %v155 = vadd.f32 %v153, %v154
        %v156 = vsel %vm141, %v139, 0.0
        %v157 = vrot.slane %v156, 4
        %v158 = vadd.f32 %v156, %v157
        %v159 = vrot.slane %v158, 2
        %v160 = vadd.f32 %v158, %v159
        %v161 = vrot.slane %v160, 1
        %v162 = vadd.f32 %v160, %v161
        %v163 = vsel %vm141, %v140, 0.0
        %v164 = vrot.slane %v163, 4
        %v165 = vadd.f32 %v163, %v164
        %v166 = vrot.slane %v165, 2
        %v167 = vadd.f32 %v165, %v166
        %v168 = vrot.slane %v167, 1
        %v169 = vadd.f32 %v167, %v168
        %170 = vrot.lane.b32.xlu0 %v148, 16
        %v171 = vpop.permute.xlu0 %170
        %172 = vrot.lane.b32.xlu0 %v155, 16
        %v173 = vpop.permute.xlu0 %172
        %174 = vrot.lane.b32.xlu0 %v162, 16
        %v175 = vpop.permute.xlu0 %174
        %176 = vrot.lane.b32.xlu0 %v169, 16
        %v177 = vpop.permute.xlu0 %176
        %v178 = vadd.f32 %v148, %v171
        %v179 = vadd.f32 %v155, %v173
        %v180 = vadd.f32 %v162, %v175
        %v181 = vadd.f32 %v169, %v177
        %182 = vrot.lane.b32.xlu0 %v178, 32
        %v183 = vpop.permute.xlu0 %182
        %184 = vrot.lane.b32.xlu0 %v179, 32
        %v185 = vpop.permute.xlu0 %184
        %186 = vrot.lane.b32.xlu0 %v180, 32
        %v187 = vpop.permute.xlu0 %186
        %188 = vrot.lane.b32.xlu0 %v181, 32
        %v189 = vpop.permute.xlu0 %188
        %v190 = vadd.f32 %v178, %v183
        %v191 = vadd.f32 %v179, %v185
        %v192 = vadd.f32 %v180, %v187
        %v193 = vadd.f32 %v181, %v189
        %194 = vrot.lane.b32.xlu0 %v190, 64
        %v195 = vpop.permute.xlu0 %194
        %196 = vrot.lane.b32.xlu0 %v191, 64
        %v197 = vpop.permute.xlu0 %196
        %198 = vrot.lane.b32.xlu0 %v192, 64
        %v199 = vpop.permute.xlu0 %198
        %200 = vrot.lane.b32.xlu0 %v193, 64
        %v201 = vpop.permute.xlu0 %200
        %v202 = vadd.f32 %v190, %v195
        %v203 = vadd.f32 %v191, %v197
        %v204 = vadd.f32 %v192, %v199
        %v205 = vadd.f32 %v193, %v201
        %v206 = vrcp.pop 16.0
        %v207 = vmul.f32 %v202, %v206
        %v208 = vmul.f32 %v203, %v206
        %v209 = vmul.f32 %v204, %v206
        %v210 = vmul.f32 %v205, %v206
        %v211 = vlaneseq
        %v212 = vshrl.u32 %v211, 7
        %v213 = vsub.s32 0, %v212
        %v214 = vrot.slane %v207, %v213
        %v215 = vlaneseq
        %v216 = vshrl.u32 %v215, 7
        %v217 = vsub.s32 0, %v216
        %v218 = vrot.slane %v208, %v217
        %v219 = vlaneseq
        %v220 = vshrl.u32 %v219, 7
        %v221 = vsub.s32 0, %v220
        %v222 = vrot.slane %v209, %v221
        %v223 = vlaneseq
        %v224 = vshrl.u32 %v223, 7
        %v225 = vsub.s32 0, %v224
        %v226 = vrot.slane %v210, %v225
        %v227 = vsub.f32 %v137, %v214
        %v228 = vsub.f32 %v138, %v218
        %v229 = vsub.f32 %v139, %v222
        %v230 = vsub.f32 %v140, %v226
        %v231 = vmul.f32 %v227, %v227
        %v232 = vmul.f32 %v228, %v228
        %v233 = vmul.f32 %v229, %v229
        %v234 = vmul.f32 %v230, %v230
        %v235 = vsel %vm141, %v231, 0.0
        %v236 = vrot.slane %v235, 4
        %v237 = vadd.f32 %v235, %v236
        %v238 = vrot.slane %v237, 2
        %v239 = vadd.f32 %v237, %v238
        %v240 = vrot.slane %v239, 1
        %v241 = vadd.f32 %v239, %v240
        %v242 = vsel %vm141, %v232, 0.0
        %v243 = vrot.slane %v242, 4
        %v244 = vadd.f32 %v242, %v243
        %v245 = vrot.slane %v244, 2
        %v246 = vadd.f32 %v244, %v245
        %v247 = vrot.slane %v246, 1
        %v248 = vadd.f32 %v246, %v247
        %v249 = vsel %vm141, %v233, 0.0
        %v250 = vrot.slane %v249, 4
        %v251 = vadd.f32 %v249, %v250
        %v252 = vrot.slane %v251, 2
        %v253 = vadd.f32 %v251, %v252
        %v254 = vrot.slane %v253, 1
        %v255 = vadd.f32 %v253, %v254
        %v256 = vsel %vm141, %v234, 0.0
        %v257 = vrot.slane %v256, 4
        %v258 = vadd.f32 %v256, %v257
        %v259 = vrot.slane %v258, 2
        %v260 = vadd.f32 %v258, %v259
        %v261 = vrot.slane %v260, 1
        %v262 = vadd.f32 %v260, %v261
        %263 = vrot.lane.b32.xlu0 %v241, 16
        %v264 = vpop.permute.xlu0 %263
        %265 = vrot.lane.b32.xlu0 %v248, 16
        %v266 = vpop.permute.xlu0 %265
        %267 = vrot.lane.b32.xlu0 %v255, 16
        %v268 = vpop.permute.xlu0 %267
        %269 = vrot.lane.b32.xlu0 %v262, 16
        %v270 = vpop.permute.xlu0 %269
        %v271 = vadd.f32 %v241, %v264
        %v272 = vadd.f32 %v248, %v266
        %v273 = vadd.f32 %v255, %v268
        %v274 = vadd.f32 %v262, %v270
        %275 = vrot.lane.b32.xlu0 %v271, 32
        %v276 = vpop.permute.xlu0 %275
        %277 = vrot.lane.b32.xlu0 %v272, 32
        %v278 = vpop.permute.xlu0 %277
        %279 = vrot.lane.b32.xlu0 %v273, 32
        %v280 = vpop.permute.xlu0 %279
        %281 = vrot.lane.b32.xlu0 %v274, 32
        %v282 = vpop.permute.xlu0 %281
        %v283 = vadd.f32 %v271, %v276
        %v284 = vadd.f32 %v272, %v278
        %v285 = vadd.f32 %v273, %v280
        %v286 = vadd.f32 %v274, %v282
        %287 = vrot.lane.b32.xlu0 %v283, 64
        %v288 = vpop.permute.xlu0 %287
        %289 = vrot.lane.b32.xlu0 %v284, 64
        %v290 = vpop.permute.xlu0 %289
        %291 = vrot.lane.b32.xlu0 %v285, 64
        %v292 = vpop.permute.xlu0 %291
        %293 = vrot.lane.b32.xlu0 %v286, 64
        %v294 = vpop.permute.xlu0 %293
        %v295 = vadd.f32 %v283, %v288
        %v296 = vadd.f32 %v284, %v290
        %v297 = vadd.f32 %v285, %v292
        %v298 = vadd.f32 %v286, %v294
        %v299 = vrcp.pop 15.0
        %v300 = vmul.f32 %v295, %v299
        %v301 = vmul.f32 %v296, %v299
        %v302 = vmul.f32 %v297, %v299
        %v303 = vmul.f32 %v298, %v299
        %v304 = vrsqrt.pop %v300
        %v305 = vmul.f32 %v300, %v304
        %vm306 = vcmp.eq.f32.partialorder %v300, inf
        %v307 = vsel %vm306, %v300, %v305
        %vm308 = vcmp.eq.f32.partialorder %v300, 0.0
        %v309 = vand.u32 %v300, 2147483648
        %v310 = vsel %vm308, %v309, %v307
        %v311 = vrsqrt.pop %v301
        %v312 = vmul.f32 %v301, %v311
        %vm313 = vcmp.eq.f32.partialorder %v301, inf
        %v314 = vsel %vm313, %v301, %v312
        %vm315 = vcmp.eq.f32.partialorder %v301, 0.0
        %v316 = vand.u32 %v301, 2147483648
        %v317 = vsel %vm315, %v316, %v314
        %v318 = vrsqrt.pop %v302
        %v319 = vmul.f32 %v302, %v318
        %vm320 = vcmp.eq.f32.partialorder %v302, inf
        %v321 = vsel %vm320, %v302, %v319
        %vm322 = vcmp.eq.f32.partialorder %v302, 0.0
        %v323 = vand.u32 %v302, 2147483648
        %v324 = vsel %vm322, %v323, %v321
        %v325 = vrsqrt.pop %v303
        %v326 = vmul.f32 %v303, %v325
        %vm327 = vcmp.eq.f32.partialorder %v303, inf
        %v328 = vsel %vm327, %v303, %v326
        %vm329 = vcmp.eq.f32.partialorder %v303, 0.0
        %v330 = vand.u32 %v303, 2147483648
        %v331 = vsel %vm329, %v330, %v328
        %v332 = vadd.f32 %v310, 1e-08
        %v333 = vadd.f32 %v317, 1e-08
        %v334 = vadd.f32 %v324, 1e-08
        %v335 = vadd.f32 %v331, 1e-08
        %v336 = vrcp.pop %v332
        %v337 = vrcp.pop %v333
        %v338 = vrcp.pop %v334
        %v339 = vrcp.pop %v335
        %v340 = vlaneseq
        %v341 = vshrl.u32 %v340, 7
        %v342 = vsub.s32 0, %v341
        %v343 = vrot.slane %v336, %v342
        %v344 = vlaneseq
        %v345 = vshrl.u32 %v344, 7
        %v346 = vsub.s32 0, %v345
        %v347 = vrot.slane %v337, %v346
        %v348 = vlaneseq
        %v349 = vshrl.u32 %v348, 7
        %v350 = vsub.s32 0, %v349
        %v351 = vrot.slane %v338, %v350
        %v352 = vlaneseq
        %v353 = vshrl.u32 %v352, 7
        %v354 = vsub.s32 0, %v353
        %v355 = vrot.slane %v339, %v354
        %v356 = vmul.f32 %v137, %v343
        %v357 = vmul.f32 %v138, %v347
        %v358 = vmul.f32 %v139, %v351
        %v359 = vmul.f32 %v140, %v355
        %v360 = vmul.f32 %v207, %v336
        %v361 = vmul.f32 %v208, %v337
        %v362 = vmul.f32 %v209, %v338
        %v363 = vmul.f32 %v210, %v339
        %v364 = vlaneseq
        %v365 = vshrl.u32 %v364, 7
        %v366 = vsub.s32 0, %v365
        %v367 = vrot.slane %v360, %v366
        %v368 = vlaneseq
        %v369 = vshrl.u32 %v368, 7
        %v370 = vsub.s32 0, %v369
        %v371 = vrot.slane %v361, %v370
        %v372 = vlaneseq
        %v373 = vshrl.u32 %v372, 7
        %v374 = vsub.s32 0, %v373
        %v375 = vrot.slane %v362, %v374
        %v376 = vlaneseq
        %v377 = vshrl.u32 %v376, 7
        %v378 = vsub.s32 0, %v377
        %v379 = vrot.slane %v363, %v378
        %v380 = vsub.f32 %v356, %v367
        %v381 = vsub.f32 %v357, %v371
        %v382 = vsub.f32 %v358, %v375
        %v383 = vsub.f32 %v359, %v379
        %384 = vst [vmem:[%s134] sm:$0x3] %v380
        %385 = vst [vmem:[%s134 + $0x2] sm:$0x3] %v381
        %386 = vst [vmem:[%s134 + $0x4] sm:$0x3] %v382
        %387 = vst [vmem:[%s134 + $0x6] sm:$0x3] %v383
        %s388 = sand.u32 %s52, 1
        %s389 = scalar_lea.sflag [#allocation4], %s388
        %s390 = sand.u32 %s52, 1
        %s391 = smul.addr %s390, 8
        %s392 = scalar_lea.vmem [#allocation5], %s391
        // Predicated region
        $region29: #{tpu_custom_call.1} parent=23 // pred_check
          %p393 = pneg %p62
        $region30: #{tpu_custom_call.1} parent=23 // pred_check_branch
          %395 = sbr.rel (%p393) target = $region32
        $region31: #{tpu_custom_call.1} parent=23 // pred_region
          %s396 = smul.u32 4, %s18
          %s398 = ssub.s32 128, 128
          %399 = vsyncadd %s389, %s398
          %s400 = smul.addr %s396, 32
          %s401 = scalar_lea.hbm %s1, %s400
          %s402 = sshll.u32 %s392, 4
          %s403 = int_to_ptr.vmem [resolvable:$true] %s402
          %408 = dma.vmem_to_hbm [thread:$0]  %s403, 128, %s401, %s389, 32, 32, 2
        $region32: #{tpu_custom_call.1} parent=23 // pred_fallthru
          _
      $region24: #{tpu_custom_call.1} parent=5 // pred_fallthru
        _
      %p409 = scmp.le.s32.totalorder 2, %s13
      // Predicated region
      $region33: #{tpu_custom_call.1} parent=5 // pred_check
        %p410 = pneg %p409
      $region34: #{tpu_custom_call.1} parent=5 // pred_check_branch
        %412 = sbr.rel (%p410) target = $region36
      $region35: #{tpu_custom_call.1} parent=5 // pred_region
        %s413 = ssub.s32 %s13, 2
        // Predicated region
        $region37: #{tpu_custom_call.1} parent=35 // pred_check
          %p414 = pneg %p68
        $region38: #{tpu_custom_call.1} parent=35 // pred_check_branch
          %416 = sbr.rel (%p414) target = $region40
        $region39: #{tpu_custom_call.1} parent=35 // pred_region
          %s417 = sand.u32 %s53, 1
          %s418 = scalar_lea.sflag [#allocation4], %s417
          %s419 = sand.u32 %s53, 1
          %s420 = smul.addr %s419, 8
          %s421 = scalar_lea.vmem [#allocation5], %s420
          %422 = dma.done %s418, 128
        $region40: #{tpu_custom_call.1} parent=35 // pred_fallthru
          _
      $region36: #{tpu_custom_call.1} parent=5 // pred_fallthru
        _
    $region6: #{tpu_custom_call.1} parent=1 // loop_footer
      %s17 = sadd.s32 1, %s13
    $region7: #{tpu_custom_call.1} parent=1 // loop_footer_branch
      %12 = sbr.rel target = $region3
    $region8: #{tpu_custom_call.1} parent=1 // loop_exit
      _
    %423 = vsyncpa [#allocation3], 1
    %s424 = scalar_lea.sflag [#allocation3], 1
    %425 = vsyncpa %s424, 1
    %426 = vsyncpa [#allocation4], 1
    %s427 = scalar_lea.sflag [#allocation4], 1
    %428 = vsyncpa %s427, 1

</llo_original>
